<compile_context>
chip_gen: v5e
topology: v5e:2x2
jax: 0.10.0
libtpu: 0.0.40
codegen_flags: <defaults>
</compile_context>

<pallas_src>
import functools

import jax
import jax.numpy as jnp
from jax.experimental import pallas as pl
from jax.experimental.pallas import tpu as pltpu


def _add_linear_bias_kernel(x_ref, wu_ref, whm_ref, wwr_ref,
                            bu_ref, bhm_ref, bwr_ref, o_ref,
                            *, matmul_dtype=None):
    # Effective weight: ultrasonograpy * sigmoid(HM70A * wrist)   -> (out, in)
    # Keep elementwise math in f32 (v5e VPU/EUP have no bf16).
    w_eff = wu_ref[...] * jax.nn.sigmoid(whm_ref[...] * wwr_ref[...])
    # Effective bias: bias_u * sigmoid(bias_HM70A * bias_wrist)   -> (1, out)
    b_eff = bu_ref[...] * jax.nn.sigmoid(bhm_ref[...] * bwr_ref[...])

    x = x_ref[...]
    if matmul_dtype is not None:
        x = x.astype(matmul_dtype)
        w_mm = w_eff.astype(matmul_dtype)
    else:
        w_mm = w_eff

    # F.linear: contract last axis of x (in) with last axis of w (in).
    # No transpose of w_eff is materialized; f32 accumulation on the MXU.
    y = jax.lax.dot_general(
        x, w_mm,
        dimension_numbers=(((1,), (1,)), ((), ())),
        preferred_element_type=jnp.float32)
    o_ref[...] = (y + b_eff).astype(o_ref.dtype)


def _add_linear_nobias_kernel(x_ref, wu_ref, whm_ref, wwr_ref, o_ref,
                              *, matmul_dtype=None):
    w_eff = wu_ref[...] * jax.nn.sigmoid(whm_ref[...] * wwr_ref[...])
    x = x_ref[...]
    if matmul_dtype is not None:
        x = x.astype(matmul_dtype)
        w_mm = w_eff.astype(matmul_dtype)
    else:
        w_mm = w_eff
    y = jax.lax.dot_general(
        x, w_mm,
        dimension_numbers=(((1,), (1,)), ((), ())),
        preferred_element_type=jnp.float32)
    o_ref[...] = y.astype(o_ref.dtype)


def _round_up(n, m):
    return ((n + m - 1) // m) * m


def add_linear(x, w_u, w_hm, w_wr, b_u=None, b_hm=None, b_wr=None,
               *, block_b=256, matmul_dtype=None):
    """Forward of the PyTorch `add_linear` module.

    x: (B, in).  weight params: (out, in).  bias params: (out,) or None.
    matmul_dtype: optionally cast the MXU operands (e.g. jnp.bfloat16 on
    v6e/v7x); accumulation stays f32.
    """
    B, Cin = x.shape
    Cout = w_u.shape[0]
    has_bias = b_u is not None

    # --- lane-dense padding -------------------------------------------------
    # Pad feature dims to multiples of 128 (lane width) and the batch dim to a
    # multiple of the batch tile (itself a multiple of 8 sublanes).
    Cin_p = _round_up(Cin, 128)
    Cout_p = _round_up(Cout, 128)
    tb = min(_round_up(B, 8), block_b)          # batch tile (multiple of 8)
    B_p = _round_up(B, tb)

    def pad2(a, rows, cols):
        return jnp.pad(a, ((0, rows - a.shape[0]), (0, cols - a.shape[1])))

    x_p = pad2(x, B_p, Cin_p)
    # Zero-padded ultrasonograpy rows/cols -> w_eff is exactly 0 there, so the
    # padded output columns are 0 (plus 0 bias) and the extra Cin columns
    # contribute nothing.  Slicing the result back is therefore exact.
    w_u_p = pad2(w_u, Cout_p, Cin_p)
    w_hm_p = pad2(w_hm, Cout_p, Cin_p)
    w_wr_p = pad2(w_wr, Cout_p, Cin_p)

    grid = (B_p // tb,)

    x_spec = pl.BlockSpec((tb, Cin_p), lambda i: (i, 0), memory_space=pltpu.VMEM)
    w_spec = pl.BlockSpec((Cout_p, Cin_p), lambda i: (0, 0), memory_space=pltpu.VMEM)
    b_spec = pl.BlockSpec((1, Cout_p), lambda i: (0, 0), memory_space=pltpu.VMEM)
    o_spec = pl.BlockSpec((tb, Cout_p), lambda i: (i, 0), memory_space=pltpu.VMEM)

    # "parallel" lets Mosaic shard the batch-tile axis across the 2 TCs on v7x.
    cparams = pltpu.CompilerParams(dimension_semantics=("parallel",))

    if has_bias:
        b_u_p = pad2(b_u.reshape(1, Cout), 1, Cout_p)
        b_hm_p = pad2(b_hm.reshape(1, Cout), 1, Cout_p)
        b_wr_p = pad2(b_wr.reshape(1, Cout), 1, Cout_p)
        kernel = functools.partial(_add_linear_bias_kernel, matmul_dtype=matmul_dtype)
        out = pl.pallas_call(
            kernel,
            out_shape=jax.ShapeDtypeStruct((B_p, Cout_p), x.dtype),
            grid=grid,
            in_specs=[x_spec, w_spec, w_spec, w_spec, b_spec, b_spec, b_spec],
            out_specs=o_spec,
            compiler_params=cparams,
        )(x_p, w_u_p, w_hm_p, w_wr_p, b_u_p, b_hm_p, b_wr_p)
    else:
        kernel = functools.partial(_add_linear_nobias_kernel, matmul_dtype=matmul_dtype)
        out = pl.pallas_call(
            kernel,
            out_shape=jax.ShapeDtypeStruct((B_p, Cout_p), x.dtype),
            grid=grid,
            in_specs=[x_spec, w_spec, w_spec, w_spec],
            out_specs=o_spec,
            compiler_params=cparams,
        )(x_p, w_u_p, w_hm_p, w_wr_p)

    return out[:B, :Cout]


if __name__ == "__main__":
    # Module config: add_linear(in_channels=32, out_channels=64, bias=True, scale=1)
    in_channels, out_channels, scale = 32, 64, 1.0
    batch = 8

    key = jax.random.PRNGKey(0)
    k_x, k_w = jax.random.split(key)

    # Parameters (per __init__):
    #   weight.ultrasonograpy ~ randn((out, in)); HM70A/miniSONO/wrist/forearm = scale*ones
    #   bias.ultrasonograpy = 0.0*ones((out,));   HM70A/miniSONO/wrist/forearm = scale*ones
    w_u = jax.random.normal(k_w, (out_channels, in_channels), dtype=jnp.float32)
    w_hm = jnp.full((out_channels, in_channels), scale, dtype=jnp.float32)
    w_wr = jnp.full((out_channels, in_channels), scale, dtype=jnp.float32)
    b_u = jnp.zeros((out_channels,), dtype=jnp.float32)
    b_hm = jnp.full((out_channels,), scale, dtype=jnp.float32)
    b_wr = jnp.full((out_channels,), scale, dtype=jnp.float32)

    x = jax.random.normal(k_x, (batch, in_channels), dtype=jnp.float32)

    y = add_linear(x, w_u, w_hm, w_wr, b_u, b_hm, b_wr)
    jax.block_until_ready(y)

    # Reference check (plain JAX) of the exact forward semantics.
    w_eff = w_u * jax.nn.sigmoid(w_hm * w_wr)
    b_eff = b_u * jax.nn.sigmoid(b_hm * b_wr)
    y_ref = x @ w_eff.T + b_eff
    assert y.shape == (batch, out_channels)
    assert jnp.allclose(y, y_ref, atol=1e-5, rtol=1e-5)

    # Also exercise the bias=None path of the module.
    y_nb = add_linear(x, w_u, w_hm, w_wr)
    jax.block_until_ready(y_nb)
    assert jnp.allclose(y_nb, x @ w_eff.T, atol=1e-5, rtol=1e-5)

    print("KERNEL_OK")
</pallas_src>

<mosaic_0001>
module attributes {stable_mosaic.version = 11 : i64} {
  func.func @_add_linear_bias_kernel(%arg0: i32, %arg1: memref<8x128xf32, #tpu.memory_space<vmem>>, %arg2: memref<128x128xf32, #tpu.memory_space<vmem>>, %arg3: memref<128x128xf32, #tpu.memory_space<vmem>>, %arg4: memref<128x128xf32, #tpu.memory_space<vmem>>, %arg5: memref<1x128xf32, #tpu.memory_space<vmem>>, %arg6: memref<1x128xf32, #tpu.memory_space<vmem>>, %arg7: memref<1x128xf32, #tpu.memory_space<vmem>>, %arg8: memref<8x128xf32, #tpu.memory_space<vmem>>) attributes {dimension_semantics = [#tpu.dimension_semantics<parallel>], iteration_bounds = array<i64: 1>, scalar_prefetch = 0 : i64, scratch_operands = 0 : i64, tpu.core_type = #tpu.core_type<tc>, window_params = [{transform_indices = @transform_0, window_bounds = array<i64: 8, 128>}, {pipeline_mode = #tpu.pipeline_mode<synchronous>, transform_indices = @transform_1, window_bounds = array<i64: 128, 128>}, {pipeline_mode = #tpu.pipeline_mode<synchronous>, transform_indices = @transform_2, window_bounds = array<i64: 128, 128>}, {pipeline_mode = #tpu.pipeline_mode<synchronous>, transform_indices = @transform_3, window_bounds = array<i64: 128, 128>}, {pipeline_mode = #tpu.pipeline_mode<synchronous>, transform_indices = @transform_4, window_bounds = array<i64: 1, 128>}, {pipeline_mode = #tpu.pipeline_mode<synchronous>, transform_indices = @transform_5, window_bounds = array<i64: 1, 128>}, {pipeline_mode = #tpu.pipeline_mode<synchronous>, transform_indices = @transform_6, window_bounds = array<i64: 1, 128>}, {transform_indices = @transform_7, window_bounds = array<i64: 8, 128>}]} {
    %c0 = arith.constant 0 : index
    %c0_0 = arith.constant 0 : index
    %0 = vector.load %arg2[%c0, %c0_0] : memref<128x128xf32, #tpu.memory_space<vmem>>, vector<128x128xf32>
    %c0_1 = arith.constant 0 : index
    %c0_2 = arith.constant 0 : index
    %1 = vector.load %arg3[%c0_1, %c0_2] : memref<128x128xf32, #tpu.memory_space<vmem>>, vector<128x128xf32>
    %c0_3 = arith.constant 0 : index
    %c0_4 = arith.constant 0 : index
    %2 = vector.load %arg4[%c0_3, %c0_4] : memref<128x128xf32, #tpu.memory_space<vmem>>, vector<128x128xf32>
    %3 = arith.mulf %1, %2 : vector<128x128xf32>
    %4 = arith.negf %3 : vector<128x128xf32>
    %5 = math.exp %4 : vector<128x128xf32>
    %cst = arith.constant 1.000000e+00 : f32
    %6 = vector.broadcast %cst : f32 to vector<128x128xf32>
    %7 = arith.addf %6, %5 : vector<128x128xf32>
    %8 = arith.divf %6, %7 : vector<128x128xf32>
    %9 = arith.mulf %0, %8 : vector<128x128xf32>
    %c0_5 = arith.constant 0 : index
    %c0_6 = arith.constant 0 : index
    %10 = vector.load %arg5[%c0_5, %c0_6] : memref<1x128xf32, #tpu.memory_space<vmem>>, vector<1x128xf32>
    %c0_7 = arith.constant 0 : index
    %c0_8 = arith.constant 0 : index
    %11 = vector.load %arg6[%c0_7, %c0_8] : memref<1x128xf32, #tpu.memory_space<vmem>>, vector<1x128xf32>
    %c0_9 = arith.constant 0 : index
    %c0_10 = arith.constant 0 : index
    %12 = vector.load %arg7[%c0_9, %c0_10] : memref<1x128xf32, #tpu.memory_space<vmem>>, vector<1x128xf32>
    %13 = arith.mulf %11, %12 : vector<1x128xf32>
    %14 = arith.negf %13 : vector<1x128xf32>
    %15 = math.exp %14 : vector<1x128xf32>
    %cst_11 = arith.constant 1.000000e+00 : f32
    %16 = vector.broadcast %cst_11 : f32 to vector<1x128xf32>
    %17 = arith.addf %16, %15 : vector<1x128xf32>
    %18 = arith.divf %16, %17 : vector<1x128xf32>
    %19 = arith.mulf %10, %18 : vector<1x128xf32>
    %c0_12 = arith.constant 0 : index
    %c0_13 = arith.constant 0 : index
    %20 = vector.load %arg1[%c0_12, %c0_13] : memref<8x128xf32, #tpu.memory_space<vmem>>, vector<8x128xf32>
    %cst_14 = arith.constant dense<0.000000e+00> : vector<8x128xf32>
    %21 = tpu.matmul %20, %9, %cst_14 {dimension_numbers = #tpu.dot_dimension_numbers<[1], [1], [0], [0], [0, 0, 1, 0], [], []>} : vector<8x128xf32>, vector<128x128xf32>, vector<8x128xf32> -> vector<8x128xf32>
    %22 = vector.broadcast %19 : vector<1x128xf32> to vector<8x128xf32>
    %23 = arith.addf %21, %22 : vector<8x128xf32>
    %c0_15 = arith.constant 0 : index
    %c0_16 = arith.constant 0 : index
    %24 = vector.load %arg8[%c0_15, %c0_16] : memref<8x128xf32, #tpu.memory_space<vmem>>, vector<8x128xf32>
    tpu.vector_store %arg8[%c0_15, %c0_16], %23 {strides = array<i32>} : memref<8x128xf32, #tpu.memory_space<vmem>>, vector<8x128xf32>,
    return
  }
  func.func @transform_0(%arg0: i32) -> (i32, i32) {
    %c0_i32 = arith.constant 0 : i32
    %c0_i32_0 = arith.constant 0 : i32
    return %arg0, %c0_i32 : i32, i32
  }
  func.func @transform_1(%arg0: i32) -> (i32, i32) {
    %c0_i32 = arith.constant 0 : i32
    %c0_i32_0 = arith.constant 0 : i32
    %c0_i32_1 = arith.constant 0 : i32
    return %c0_i32, %c0_i32_0 : i32, i32
  }
  func.func @transform_2(%arg0: i32) -> (i32, i32) {
    %c0_i32 = arith.constant 0 : i32
    %c0_i32_0 = arith.constant 0 : i32
    %c0_i32_1 = arith.constant 0 : i32
    return %c0_i32, %c0_i32_0 : i32, i32
  }
  func.func @transform_3(%arg0: i32) -> (i32, i32) {
    %c0_i32 = arith.constant 0 : i32
    %c0_i32_0 = arith.constant 0 : i32
    %c0_i32_1 = arith.constant 0 : i32
    return %c0_i32, %c0_i32_0 : i32, i32
  }
  func.func @transform_4(%arg0: i32) -> (i32, i32) {
    %c0_i32 = arith.constant 0 : i32
    %c0_i32_0 = arith.constant 0 : i32
    %c0_i32_1 = arith.constant 0 : i32
    return %c0_i32, %c0_i32_0 : i32, i32
  }
  func.func @transform_5(%arg0: i32) -> (i32, i32) {
    %c0_i32 = arith.constant 0 : i32
    %c0_i32_0 = arith.constant 0 : i32
    %c0_i32_1 = arith.constant 0 : i32
    return %c0_i32, %c0_i32_0 : i32, i32
  }
  func.func @transform_6(%arg0: i32) -> (i32, i32) {
    %c0_i32 = arith.constant 0 : i32
    %c0_i32_0 = arith.constant 0 : i32
    %c0_i32_1 = arith.constant 0 : i32
    return %c0_i32, %c0_i32_0 : i32, i32
  }
  func.func @transform_7(%arg0: i32) -> (i32, i32) {
    %c0_i32 = arith.constant 0 : i32
    %c0_i32_0 = arith.constant 0 : i32
    return %arg0, %c0_i32 : i32, i32
  }
}

</mosaic_0001>

<llo_original>
// kernel: tpu_custom_call.1
$region0: #{tpu_custom_call.1}
  #allocation0 [shape = 'u32[]', space=smem, size = 0x4, offset = 0x4, fixed_abs, tag = 'smem constant byte address 0x4 - core index']
  #allocation1 [shape = 'u32[72,128]{1,0:T(1,128)}', space=vmem, size = 0x9000, scoped, tag = 'internal scratch']
  %s0 = inlined_call_operand.hbm [shape: f32[8,128], index: 0, kind: input, shape index: {}]
  %s1 = inlined_call_operand.hbm [shape: f32[128,128], index: 1, kind: input, shape index: {}]
  %s2 = inlined_call_operand.hbm [shape: f32[128,128], index: 2, kind: input, shape index: {}]
  %s3 = inlined_call_operand.hbm [shape: f32[128,128], index: 3, kind: input, shape index: {}]
  %s4 = inlined_call_operand.vmem [shape: f32[1,128], index: 4, kind: input, shape index: {}]
  %s5 = inlined_call_operand.vmem [shape: f32[1,128], index: 5, kind: input, shape index: {}]
  %s6 = inlined_call_operand.vmem [shape: f32[1,128], index: 6, kind: input, shape index: {}]
  %s7 = inlined_call_operand.hbm [shape: f32[8,128], index: 7, kind: output, shape index: {}]
  %s8 = sld [smem:[#allocation0]]
  $region54: #{tpu_custom_call.1} parent=0
    _
  %s10 = ssub.s32 1, %s8
  %s11 = scalar_select 0, %s10, %s8
  $region1: #{tpu_custom_call.1} parent=0
    #allocation2 [shape = 'u8[4096]{0}', space=vmem, size = 0x1000, scoped, tag = 'input window, operand 0, single buffered']
    #allocation3 [shape = 's32[1]{0}', space=sflag, size = 0x4, scoped, tag = 'scoped memory for tpu_custom_call.1']
    #allocation4 [shape = 's32[1]{0}', space=sflag, size = 0x4, scoped, tag = 'scoped memory for tpu_custom_call.1']
    #allocation5 [shape = 'u8[65536]{0}', space=vmem, size = 0x10000, scoped, tag = 'input window, operand 1, single buffered']
    #allocation6 [shape = 's32[1]{0}', space=sflag, size = 0x4, scoped, tag = 'scoped memory for tpu_custom_call.1']
    #allocation7 [shape = 'u8[65536]{0}', space=vmem, size = 0x10000, scoped, tag = 'input window, operand 2, single buffered']
    #allocation8 [shape = 'u8[65536]{0}', space=vmem, size = 0x10000, scoped, tag = 'input window, operand 3, single buffered']
    #allocation9 [shape = 's32[1]{0}', space=sflag, size = 0x4, scoped, tag = 'scoped memory for tpu_custom_call.1']
    #allocation10 [shape = 'u8[4096]{0}', space=vmem, size = 0x1000, scoped, tag = 'output window, operand 0, single buffered']
    %12 = vsyncpa [#allocation3], 0
    %13 = vsyncpa [#allocation6], 0
    %14 = vsyncpa [#allocation9], 0
    %15 = vsyncpa [#allocation4], 0
    // Predicated region
    $region2: #{tpu_custom_call.1} parent=1 // pred_check
      _
    $region3: #{tpu_custom_call.1} parent=1 // pred_check_branch
      %17 = sbr.rel (0) target = $region5
    $region4: #{tpu_custom_call.1} parent=1 // pred_region
      %19 = vsyncadd [#allocation3], 0
      %s21 = sshll.u32 %s0, 4
      %s22 = int_to_ptr.hbm [resolvable:$true] %s21
      %s23 = sshll.u32 [#allocation2], 4
      %s24 = int_to_ptr.vmem [resolvable:$true] %s23
      %26 = dma.hbm_to_vmem [thread:$0]  %s22, 128, %s24, [#allocation3]
    $region5: #{tpu_custom_call.1} parent=1 // pred_fallthru
      _
    // Predicated region
    $region6: #{tpu_custom_call.1} parent=1 // pred_check
      _
    $region7: #{tpu_custom_call.1} parent=1 // pred_check_branch
      %28 = sbr.rel (0) target = $region9
    $region8: #{tpu_custom_call.1} parent=1 // pred_region
      %30 = vsyncadd [#allocation6], 0
      %s31 = sshll.u32 %s1, 4
      %s32 = int_to_ptr.hbm [resolvable:$true] %s31
      %s33 = sshll.u32 [#allocation5], 4
      %s34 = int_to_ptr.vmem [resolvable:$true] %s33
      %39 = dma.hbm_to_vmem [thread:$0]  %s32, 2048, %s34, [#allocation6], 128, 128, 8
    $region9: #{tpu_custom_call.1} parent=1 // pred_fallthru
      _
    // Predicated region
    $region10: #{tpu_custom_call.1} parent=1 // pred_check
      _
    $region11: #{tpu_custom_call.1} parent=1 // pred_check_branch
      %41 = sbr.rel (0) target = $region13
    $region12: #{tpu_custom_call.1} parent=1 // pred_region
      %43 = vsyncadd [#allocation6], 0
      %s44 = sshll.u32 %s2, 4
      %s45 = int_to_ptr.hbm [resolvable:$true] %s44
      %s46 = sshll.u32 [#allocation7], 4
      %s47 = int_to_ptr.vmem [resolvable:$true] %s46
      %52 = dma.hbm_to_vmem [thread:$0]  %s45, 2048, %s47, [#allocation6], 128, 128, 8
    $region13: #{tpu_custom_call.1} parent=1 // pred_fallthru
      _
    // Predicated region
    $region14: #{tpu_custom_call.1} parent=1 // pred_check
      _
    $region15: #{tpu_custom_call.1} parent=1 // pred_check_branch
      %54 = sbr.rel (0) target = $region17
    $region16: #{tpu_custom_call.1} parent=1 // pred_region
      %56 = vsyncadd [#allocation9], 0
      %s57 = sshll.u32 %s3, 4
      %s58 = int_to_ptr.hbm [resolvable:$true] %s57
      %s59 = sshll.u32 [#allocation8], 4
      %s60 = int_to_ptr.vmem [resolvable:$true] %s59
      %65 = dma.hbm_to_vmem [thread:$0]  %s58, 2048, %s60, [#allocation9], 128, 128, 8
    $region17: #{tpu_custom_call.1} parent=1 // pred_fallthru
      _
    // Predicated region
    $region18: #{tpu_custom_call.1} parent=1 // pred_check
      _
    $region19: #{tpu_custom_call.1} parent=1 // pred_check_branch
      %67 = sbr.rel (0) target = $region21
    $region20: #{tpu_custom_call.1} parent=1 // pred_region
      _
    $region21: #{tpu_custom_call.1} parent=1 // pred_fallthru
      _
    // Predicated region
    $region22: #{tpu_custom_call.1} parent=1 // pred_check
      _
    $region23: #{tpu_custom_call.1} parent=1 // pred_check_branch
      %69 = sbr.rel (0) target = $region25
    $region24: #{tpu_custom_call.1} parent=1 // pred_region
      _
    $region25: #{tpu_custom_call.1} parent=1 // pred_fallthru
      _
    // Predicated region
    $region26: #{tpu_custom_call.1} parent=1 // pred_check
      _
    $region27: #{tpu_custom_call.1} parent=1 // pred_check_branch
      %71 = sbr.rel (0) target = $region29
    $region28: #{tpu_custom_call.1} parent=1 // pred_region
      _
    $region29: #{tpu_custom_call.1} parent=1 // pred_fallthru
      _
    // Predicated region
    $region30: #{tpu_custom_call.1} parent=1 // pred_check
      _
    $region31: #{tpu_custom_call.1} parent=1 // pred_check_branch
      %73 = sbr.rel (0) target = $region33
    $region32: #{tpu_custom_call.1} parent=1 // pred_region
      %75 = dma.done [#allocation3], 128
    $region33: #{tpu_custom_call.1} parent=1 // pred_fallthru
      _
    // Predicated region
    $region34: #{tpu_custom_call.1} parent=1 // pred_check
      _
    $region35: #{tpu_custom_call.1} parent=1 // pred_check_branch
      %77 = sbr.rel (0) target = $region37
    $region36: #{tpu_custom_call.1} parent=1 // pred_region
      %79 = dma.done [#allocation6], 2048
    $region37: #{tpu_custom_call.1} parent=1 // pred_fallthru
      _
    // Predicated region
    $region38: #{tpu_custom_call.1} parent=1 // pred_check
      _
    $region39: #{tpu_custom_call.1} parent=1 // pred_check_branch
      %81 = sbr.rel (0) target = $region41
    $region40: #{tpu_custom_call.1} parent=1 // pred_region
      %83 = dma.done [#allocation6], 2048
    $region41: #{tpu_custom_call.1} parent=1 // pred_fallthru
      _
    // Predicated region
    $region42: #{tpu_custom_call.1} parent=1 // pred_check
      _
    $region43: #{tpu_custom_call.1} parent=1 // pred_check_branch
      %85 = sbr.rel (0) target = $region45
    $region44: #{tpu_custom_call.1} parent=1 // pred_region
      %87 = dma.done [#allocation9], 2048
    $region45: #{tpu_custom_call.1} parent=1 // pred_fallthru
      _
    %v88 = vld [vmem:[#allocation5] sm:$0xff]
    %v89 = vld [vmem:[#allocation5 + $0x8] sm:$0xff]
    %v90 = vld [vmem:[#allocation5 + $0x10] sm:$0xff]
    %v91 = vld [vmem:[#allocation5 + $0x18] sm:$0xff]
    %v92 = vld [vmem:[#allocation5 + $0x20] sm:$0xff]
    %v93 = vld [vmem:[#allocation5 + $0x28] sm:$0xff]
    %v94 = vld [vmem:[#allocation5 + $0x30] sm:$0xff]
    %v95 = vld [vmem:[#allocation5 + $0x38] sm:$0xff]
    %v96 = vld [vmem:[#allocation5 + $0x40] sm:$0xff]
    %v97 = vld [vmem:[#allocation5 + $0x48] sm:$0xff]
    %v98 = vld [vmem:[#allocation5 + $0x50] sm:$0xff]
    %v99 = vld [vmem:[#allocation5 + $0x58] sm:$0xff]
    %v100 = vld [vmem:[#allocation5 + $0x60] sm:$0xff]
    %v101 = vld [vmem:[#allocation5 + $0x68] sm:$0xff]
    %v102 = vld [vmem:[#allocation5 + $0x70] sm:$0xff]
    %v103 = vld [vmem:[#allocation5 + $0x78] sm:$0xff]
    %v104 = vld [vmem:[#allocation7] sm:$0xff]
    %v105 = vld [vmem:[#allocation7 + $0x8] sm:$0xff]
    %v106 = vld [vmem:[#allocation7 + $0x10] sm:$0xff]
    %v107 = vld [vmem:[#allocation7 + $0x18] sm:$0xff]
    %v108 = vld [vmem:[#allocation7 + $0x20] sm:$0xff]
    %v109 = vld [vmem:[#allocation7 + $0x28] sm:$0xff]
    %v110 = vld [vmem:[#allocation7 + $0x30] sm:$0xff]
    %v111 = vld [vmem:[#allocation7 + $0x38] sm:$0xff]
    %v112 = vld [vmem:[#allocation7 + $0x40] sm:$0xff]
    %v113 = vld [vmem:[#allocation7 + $0x48] sm:$0xff]
    %v114 = vld [vmem:[#allocation7 + $0x50] sm:$0xff]
    %v115 = vld [vmem:[#allocation7 + $0x58] sm:$0xff]
    %v116 = vld [vmem:[#allocation7 + $0x60] sm:$0xff]
    %v117 = vld [vmem:[#allocation7 + $0x68] sm:$0xff]
    %v118 = vld [vmem:[#allocation7 + $0x70] sm:$0xff]
    %v119 = vld [vmem:[#allocation7 + $0x78] sm:$0xff]
    %v120 = vld [vmem:[#allocation8] sm:$0xff]
    %v121 = vld [vmem:[#allocation8 + $0x8] sm:$0xff]
    %v122 = vld [vmem:[#allocation8 + $0x10] sm:$0xff]
    %v123 = vld [vmem:[#allocation8 + $0x18] sm:$0xff]
    %v124 = vld [vmem:[#allocation8 + $0x20] sm:$0xff]
    %v125 = vld [vmem:[#allocation8 + $0x28] sm:$0xff]
    %v126 = vld [vmem:[#allocation8 + $0x30] sm:$0xff]
    %v127 = vld [vmem:[#allocation8 + $0x38] sm:$0xff]
    %v128 = vld [vmem:[#allocation8 + $0x40] sm:$0xff]
    %v129 = vld [vmem:[#allocation8 + $0x48] sm:$0xff]
    %v130 = vld [vmem:[#allocation8 + $0x50] sm:$0xff]
    %v131 = vld [vmem:[#allocation8 + $0x58] sm:$0xff]
    %v132 = vld [vmem:[#allocation8 + $0x60] sm:$0xff]
    %v133 = vld [vmem:[#allocation8 + $0x68] sm:$0xff]
    %v134 = vld [vmem:[#allocation8 + $0x70] sm:$0xff]
    %v135 = vld [vmem:[#allocation8 + $0x78] sm:$0xff]
    %v136 = vmul.f32 %v104, %v120
    %v137 = vmul.f32 %v105, %v121
    %v138 = vmul.f32 %v106, %v122
    %v139 = vmul.f32 %v107, %v123
    %v140 = vmul.f32 %v108, %v124
    %v141 = vmul.f32 %v109, %v125
    %v142 = vmul.f32 %v110, %v126
    %v143 = vmul.f32 %v111, %v127
    %v144 = vmul.f32 %v112, %v128
    %v145 = vmul.f32 %v113, %v129
    %v146 = vmul.f32 %v114, %v130
    %v147 = vmul.f32 %v115, %v131
    %v148 = vmul.f32 %v116, %v132
    %v149 = vmul.f32 %v117, %v133
    %v150 = vmul.f32 %v118, %v134
    %v151 = vmul.f32 %v119, %v135
    %v152 = vxor.u32 %v136, 2147483648
    %v153 = vxor.u32 %v137, 2147483648
    %v154 = vxor.u32 %v138, 2147483648
    %v155 = vxor.u32 %v139, 2147483648
    %v156 = vxor.u32 %v140, 2147483648
    %v157 = vxor.u32 %v141, 2147483648
    %v158 = vxor.u32 %v142, 2147483648
    %v159 = vxor.u32 %v143, 2147483648
    %v160 = vxor.u32 %v144, 2147483648
    %v161 = vxor.u32 %v145, 2147483648
    %v162 = vxor.u32 %v146, 2147483648
    %v163 = vxor.u32 %v147, 2147483648
    %v164 = vxor.u32 %v148, 2147483648
    %v165 = vxor.u32 %v149, 2147483648
    %v166 = vxor.u32 %v150, 2147483648
    %v167 = vxor.u32 %v151, 2147483648
    %v168 = vmul.f32 %v152, 1.442695
    %v169 = vpow.pop %v168
    %v170 = vmul.f32 %v153, 1.442695
    %v171 = vpow.pop %v170
    %v172 = vmul.f32 %v154, 1.442695
    %v173 = vpow.pop %v172
    %v174 = vmul.f32 %v155, 1.442695
    %v175 = vpow.pop %v174
    %v176 = vmul.f32 %v156, 1.442695
    %v177 = vpow.pop %v176
    %v178 = vmul.f32 %v157, 1.442695
    %v179 = vpow.pop %v178
    %v180 = vmul.f32 %v158, 1.442695
    %v181 = vpow.pop %v180
    %v182 = vmul.f32 %v159, 1.442695
    %v183 = vpow.pop %v182
    %v184 = vmul.f32 %v160, 1.442695
    %v185 = vpow.pop %v184
    %v186 = vmul.f32 %v161, 1.442695
    %v187 = vpow.pop %v186
    %v188 = vmul.f32 %v162, 1.442695
    %v189 = vpow.pop %v188
    %v190 = vmul.f32 %v163, 1.442695
    %v191 = vpow.pop %v190
    %v192 = vmul.f32 %v164, 1.442695
    %v193 = vpow.pop %v192
    %v194 = vmul.f32 %v165, 1.442695
    %v195 = vpow.pop %v194
    %v196 = vmul.f32 %v166, 1.442695
    %v197 = vpow.pop %v196
    %v198 = vmul.f32 %v167, 1.442695
    %v199 = vpow.pop %v198
    %v200 = vadd.f32 %v169, 1.0
    %v201 = vadd.f32 %v171, 1.0
    %v202 = vadd.f32 %v173, 1.0
    %v203 = vadd.f32 %v175, 1.0
    %v204 = vadd.f32 %v177, 1.0
    %v205 = vadd.f32 %v179, 1.0
    %v206 = vadd.f32 %v181, 1.0
    %v207 = vadd.f32 %v183, 1.0
    %v208 = vadd.f32 %v185, 1.0
    %v209 = vadd.f32 %v187, 1.0
    %v210 = vadd.f32 %v189, 1.0
    %v211 = vadd.f32 %v191, 1.0
    %v212 = vadd.f32 %v193, 1.0
    %v213 = vadd.f32 %v195, 1.0
    %v214 = vadd.f32 %v197, 1.0
    %v215 = vadd.f32 %v199, 1.0
    %v216 = vrcp.pop %v200
    %v217 = vmul.f32 %v200, %v216
    %v218 = vsub.f32 1.0, %v217
    %v219 = vmul.f32 %v216, %v218
    %v220 = vadd.f32 %v216, %v219
    %vm221 = vweird.f32 %v200
    %vm222 = vweird.f32 %v216
    %vm223 = vmor %vm221, %vm222
    %v224 = vsel %vm223, %v216, %v220
    %v225 = vand.u32 2147483647, %v200
    %vm226 = vcmp.eq.f32.partialorder %v225, 8.507059e+37
    %v227 = vand.u32 %v200, 2147483648
    %v228 = vor.u32 1.1754944e-38, %v227
    %v229 = vsel %vm226, %v228, %v224
    %v230 = vmul.f32 1.0, %v229
    %v231 = vrcp.pop %v201
    %v232 = vmul.f32 %v201, %v231
    %v233 = vsub.f32 1.0, %v232
    %v234 = vmul.f32 %v231, %v233
    %v235 = vadd.f32 %v231, %v234
    %vm236 = vweird.f32 %v201
    %vm237 = vweird.f32 %v231
    %vm238 = vmor %vm236, %vm237
    %v239 = vsel %vm238, %v231, %v235
    %v240 = vand.u32 2147483647, %v201
    %vm241 = vcmp.eq.f32.partialorder %v240, 8.507059e+37
    %v242 = vand.u32 %v201, 2147483648
    %v243 = vor.u32 1.1754944e-38, %v242
    %v244 = vsel %vm241, %v243, %v239
    %v245 = vmul.f32 1.0, %v244
    %v246 = vrcp.pop %v202
    %v247 = vmul.f32 %v202, %v246
    %v248 = vsub.f32 1.0, %v247
    %v249 = vmul.f32 %v246, %v248
    %v250 = vadd.f32 %v246, %v249
    %vm251 = vweird.f32 %v202
    %vm252 = vweird.f32 %v246
    %vm253 = vmor %vm251, %vm252
    %v254 = vsel %vm253, %v246, %v250
    %v255 = vand.u32 2147483647, %v202
    %vm256 = vcmp.eq.f32.partialorder %v255, 8.507059e+37
    %v257 = vand.u32 %v202, 2147483648
    %v258 = vor.u32 1.1754944e-38, %v257
    %v259 = vsel %vm256, %v258, %v254
    %v260 = vmul.f32 1.0, %v259
    %v261 = vrcp.pop %v203
    %v262 = vmul.f32 %v203, %v261
    %v263 = vsub.f32 1.0, %v262
    %v264 = vmul.f32 %v261, %v263
    %v265 = vadd.f32 %v261, %v264
    %vm266 = vweird.f32 %v203
    %vm267 = vweird.f32 %v261
    %vm268 = vmor %vm266, %vm267
    %v269 = vsel %vm268, %v261, %v265
    %v270 = vand.u32 2147483647, %v203
    %vm271 = vcmp.eq.f32.partialorder %v270, 8.507059e+37
    %v272 = vand.u32 %v203, 2147483648
    %v273 = vor.u32 1.1754944e-38, %v272
    %v274 = vsel %vm271, %v273, %v269
    %v275 = vmul.f32 1.0, %v274
    %v276 = vrcp.pop %v204
    %v277 = vmul.f32 %v204, %v276
    %v278 = vsub.f32 1.0, %v277
    %v279 = vmul.f32 %v276, %v278
    %v280 = vadd.f32 %v276, %v279
    %vm281 = vweird.f32 %v204
    %vm282 = vweird.f32 %v276
    %vm283 = vmor %vm281, %vm282
    %v284 = vsel %vm283, %v276, %v280
    %v285 = vand.u32 2147483647, %v204
    %vm286 = vcmp.eq.f32.partialorder %v285, 8.507059e+37
    %v287 = vand.u32 %v204, 2147483648
    %v288 = vor.u32 1.1754944e-38, %v287
    %v289 = vsel %vm286, %v288, %v284
    %v290 = vmul.f32 1.0, %v289
    %v291 = vrcp.pop %v205
    %v292 = vmul.f32 %v205, %v291
    %v293 = vsub.f32 1.0, %v292
    %v294 = vmul.f32 %v291, %v293
    %v295 = vadd.f32 %v291, %v294
    %vm296 = vweird.f32 %v205
    %vm297 = vweird.f32 %v291
    %vm298 = vmor %vm296, %vm297
    %v299 = vsel %vm298, %v291, %v295
    %v300 = vand.u32 2147483647, %v205
    %vm301 = vcmp.eq.f32.partialorder %v300, 8.507059e+37
    %v302 = vand.u32 %v205, 2147483648
    %v303 = vor.u32 1.1754944e-38, %v302
    %v304 = vsel %vm301, %v303, %v299
    %v305 = vmul.f32 1.0, %v304
    %v306 = vrcp.pop %v206
    %v307 = vmul.f32 %v206, %v306
    %v308 = vsub.f32 1.0, %v307
    %v309 = vmul.f32 %v306, %v308
    %v310 = vadd.f32 %v306, %v309
    %vm311 = vweird.f32 %v206
    %vm312 = vweird.f32 %v306
    %vm313 = vmor %vm311, %vm312
    %v314 = vsel %vm313, %v306, %v310
    %v315 = vand.u32 2147483647, %v206
    %vm316 = vcmp.eq.f32.partialorder %v315, 8.507059e+37
    %v317 = vand.u32 %v206, 2147483648
    %v318 = vor.u32 1.1754944e-38, %v317
    %v319 = vsel %vm316, %v318, %v314
    %v320 = vmul.f32 1.0, %v319
    %v321 = vrcp.pop %v207
    %v322 = vmul.f32 %v207, %v321
    %v323 = vsub.f32 1.0, %v322
    %v324 = vmul.f32 %v321, %v323
    %v325 = vadd.f32 %v321, %v324
    %vm326 = vweird.f32 %v207
    %vm327 = vweird.f32 %v321
    %vm328 = vmor %vm326, %vm327
    %v329 = vsel %vm328, %v321, %v325
    %v330 = vand.u32 2147483647, %v207
    %vm331 = vcmp.eq.f32.partialorder %v330, 8.507059e+37
    %v332 = vand.u32 %v207, 2147483648
    %v333 = vor.u32 1.1754944e-38, %v332
    %v334 = vsel %vm331, %v333, %v329
    %v335 = vmul.f32 1.0, %v334
    %v336 = vrcp.pop %v208
    %v337 = vmul.f32 %v208, %v336
    %v338 = vsub.f32 1.0, %v337
    %v339 = vmul.f32 %v336, %v338
    %v340 = vadd.f32 %v336, %v339
    %vm341 = vweird.f32 %v208
    %vm342 = vweird.f32 %v336
    %vm343 = vmor %vm341, %vm342
    %v344 = vsel %vm343, %v336, %v340
    %v345 = vand.u32 2147483647, %v208
    %vm346 = vcmp.eq.f32.partialorder %v345, 8.507059e+37
    %v347 = vand.u32 %v208, 2147483648
    %v348 = vor.u32 1.1754944e-38, %v347
    %v349 = vsel %vm346, %v348, %v344
    %v350 = vmul.f32 1.0, %v349
    %v351 = vrcp.pop %v209
    %v352 = vmul.f32 %v209, %v351
    %v353 = vsub.f32 1.0, %v352
    %v354 = vmul.f32 %v351, %v353
    %v355 = vadd.f32 %v351, %v354
    %vm356 = vweird.f32 %v209
    %vm357 = vweird.f32 %v351
    %vm358 = vmor %vm356, %vm357
    %v359 = vsel %vm358, %v351, %v355
    %v360 = vand.u32 2147483647, %v209
    %vm361 = vcmp.eq.f32.partialorder %v360, 8.507059e+37
    %v362 = vand.u32 %v209, 2147483648
    %v363 = vor.u32 1.1754944e-38, %v362
    %v364 = vsel %vm361, %v363, %v359
    %v365 = vmul.f32 1.0, %v364
    %v366 = vrcp.pop %v210
    %v367 = vmul.f32 %v210, %v366
    %v368 = vsub.f32 1.0, %v367
    %v369 = vmul.f32 %v366, %v368
    %v370 = vadd.f32 %v366, %v369
    %vm371 = vweird.f32 %v210
    %vm372 = vweird.f32 %v366
    %vm373 = vmor %vm371, %vm372
    %v374 = vsel %vm373, %v366, %v370
    %v375 = vand.u32 2147483647, %v210
    %vm376 = vcmp.eq.f32.partialorder %v375, 8.507059e+37
    %v377 = vand.u32 %v210, 2147483648
    %v378 = vor.u32 1.1754944e-38, %v377
    %v379 = vsel %vm376, %v378, %v374
    %v380 = vmul.f32 1.0, %v379
    %v381 = vrcp.pop %v211
    %v382 = vmul.f32 %v211, %v381
    %v383 = vsub.f32 1.0, %v382
    %v384 = vmul.f32 %v381, %v383
    %v385 = vadd.f32 %v381, %v384
    %vm386 = vweird.f32 %v211
    %vm387 = vweird.f32 %v381
    %vm388 = vmor %vm386, %vm387
    %v389 = vsel %vm388, %v381, %v385
    %v390 = vand.u32 2147483647, %v211
    %vm391 = vcmp.eq.f32.partialorder %v390, 8.507059e+37
    %v392 = vand.u32 %v211, 2147483648
    %v393 = vor.u32 1.1754944e-38, %v392
    %v394 = vsel %vm391, %v393, %v389
    %v395 = vmul.f32 1.0, %v394
    %v396 = vrcp.pop %v212
    %v397 = vmul.f32 %v212, %v396
    %v398 = vsub.f32 1.0, %v397
    %v399 = vmul.f32 %v396, %v398
    %v400 = vadd.f32 %v396, %v399
    %vm401 = vweird.f32 %v212
    %vm402 = vweird.f32 %v396
    %vm403 = vmor %vm401, %vm402
    %v404 = vsel %vm403, %v396, %v400
    %v405 = vand.u32 2147483647, %v212
    %vm406 = vcmp.eq.f32.partialorder %v405, 8.507059e+37
    %v407 = vand.u32 %v212, 2147483648
    %v408 = vor.u32 1.1754944e-38, %v407
    %v409 = vsel %vm406, %v408, %v404
    %v410 = vmul.f32 1.0, %v409
    %v411 = vrcp.pop %v213
    %v412 = vmul.f32 %v213, %v411
    %v413 = vsub.f32 1.0, %v412
    %v414 = vmul.f32 %v411, %v413
    %v415 = vadd.f32 %v411, %v414
    %vm416 = vweird.f32 %v213
    %vm417 = vweird.f32 %v411
    %vm418 = vmor %vm416, %vm417
    %v419 = vsel %vm418, %v411, %v415
    %v420 = vand.u32 2147483647, %v213
    %vm421 = vcmp.eq.f32.partialorder %v420, 8.507059e+37
    %v422 = vand.u32 %v213, 2147483648
    %v423 = vor.u32 1.1754944e-38, %v422
    %v424 = vsel %vm421, %v423, %v419
    %v425 = vmul.f32 1.0, %v424
    %v426 = vrcp.pop %v214
    %v427 = vmul.f32 %v214, %v426
    %v428 = vsub.f32 1.0, %v427
    %v429 = vmul.f32 %v426, %v428
    %v430 = vadd.f32 %v426, %v429
    %vm431 = vweird.f32 %v214
    %vm432 = vweird.f32 %v426
    %vm433 = vmor %vm431, %vm432
    %v434 = vsel %vm433, %v426, %v430
    %v435 = vand.u32 2147483647, %v214
    %vm436 = vcmp.eq.f32.partialorder %v435, 8.507059e+37
    %v437 = vand.u32 %v214, 2147483648
    %v438 = vor.u32 1.1754944e-38, %v437
    %v439 = vsel %vm436, %v438, %v434
    %v440 = vmul.f32 1.0, %v439
    %v441 = vrcp.pop %v215
    %v442 = vmul.f32 %v215, %v441
    %v443 = vsub.f32 1.0, %v442
    %v444 = vmul.f32 %v441, %v443
    %v445 = vadd.f32 %v441, %v444
    %vm446 = vweird.f32 %v215
    %vm447 = vweird.f32 %v441
    %vm448 = vmor %vm446, %vm447
    %v449 = vsel %vm448, %v441, %v445
    %v450 = vand.u32 2147483647, %v215
    %vm451 = vcmp.eq.f32.partialorder %v450, 8.507059e+37
    %v452 = vand.u32 %v215, 2147483648
    %v453 = vor.u32 1.1754944e-38, %v452
    %v454 = vsel %vm451, %v453, %v449
    %v455 = vmul.f32 1.0, %v454
    %v456 = vmul.f32 %v88, %v230
    %v457 = vmul.f32 %v89, %v245
    %v458 = vmul.f32 %v90, %v260
    %v459 = vmul.f32 %v91, %v275
    %v460 = vmul.f32 %v92, %v290
    %v461 = vmul.f32 %v93, %v305
    %v462 = vmul.f32 %v94, %v320
    %v463 = vmul.f32 %v95, %v335
    %v464 = vmul.f32 %v96, %v350
    %v465 = vmul.f32 %v97, %v365
    %v466 = vmul.f32 %v98, %v380
    %v467 = vmul.f32 %v99, %v395
    %v468 = vmul.f32 %v100, %v410
    %v469 = vmul.f32 %v101, %v425
    %v470 = vmul.f32 %v102, %v440
    %v471 = vmul.f32 %v103, %v455
    %v472 = vld [vmem:[%s4] sm:$0x1]
    %v473 = vld [vmem:[%s5] sm:$0x1]
    %v474 = vld [vmem:[%s6] sm:$0x1]
    %v475 = vmul.f32 %v473, %v474
    %v476 = vxor.u32 %v475, 2147483648
    %v477 = vmul.f32 %v476, 1.442695
    %v478 = vpow.pop %v477
    %v479 = vadd.f32 %v478, 1.0
    %v480 = vrcp.pop %v479
    %v481 = vmul.f32 %v479, %v480
    %v482 = vsub.f32 1.0, %v481
    %v483 = vmul.f32 %v480, %v482
    %v484 = vadd.f32 %v480, %v483
    %vm485 = vweird.f32 %v479
    %vm486 = vweird.f32 %v480
    %vm487 = vmor %vm485, %vm486
    %v488 = vsel %vm487, %v480, %v484
    %v489 = vand.u32 2147483647, %v479
    %vm490 = vcmp.eq.f32.partialorder %v489, 8.507059e+37
    %v491 = vand.u32 %v479, 2147483648
    %v492 = vor.u32 1.1754944e-38, %v491
    %v493 = vsel %vm490, %v492, %v488
    %v494 = vmul.f32 1.0, %v493
    %v495 = vmul.f32 %v472, %v494
    %v496 = vld [vmem:[#allocation2] sm:$0xff]
    %v498 = vperm.slane %v495, 0
    %500 = vmatpush.xpose.msra.mxu0 %v471
    %501 = vmatpush.xpose.msra.mxu0 %v470
    %502 = vmatpush.xpose.msra.mxu0 %v469
    %503 = vmatpush.xpose.msra.mxu0 %v468
    %504 = vmatpush.xpose.msra.mxu0 %v467
    %505 = vmatpush.xpose.msra.mxu0 %v466
    %506 = vmatpush.xpose.msra.mxu0 %v465
    %507 = vmatpush.xpose.msra.mxu0 %v464
    %508 = vmatpush.xpose.msra.mxu0 %v463
    %509 = vmatpush.xpose.msra.mxu0 %v462
    %510 = vmatpush.xpose.msra.mxu0 %v461
    %511 = vmatpush.xpose.msra.mxu0 %v460
    %512 = vmatpush.xpose.msra.mxu0 %v459
    %513 = vmatpush.xpose.msra.mxu0 %v458
    %514 = vmatpush.xpose.msra.mxu0 %v457
    %515 = vmatpush.xpose.msra.mxu0 %v456
    %516 = vmatmul.f32.gmra.mxu0 %v496
    %v517 = vpop.f32.mrf.mxu0
    %v518 = vadd.f32 %v498, %v517
    %519 = vdwg.mxu0
    %520 = vst [vmem:[#allocation10] sm:$0xff] %v518
    // Predicated region
    $region46: #{tpu_custom_call.1} parent=1 // pred_check
      _
    $region47: #{tpu_custom_call.1} parent=1 // pred_check_branch
      %522 = sbr.rel (0) target = $region49
    $region48: #{tpu_custom_call.1} parent=1 // pred_region
      %524 = vsyncadd [#allocation4], 0
      %s526 = sshll.u32 [#allocation10], 4
      %s527 = int_to_ptr.vmem [resolvable:$true] %s526
      %s528 = sshll.u32 %s7, 4
      %s529 = int_to_ptr.hbm [resolvable:$true] %s528
      %531 = dma.vmem_to_hbm [thread:$0]  %s527, 128, %s529, [#allocation4]
    $region49: #{tpu_custom_call.1} parent=1 // pred_fallthru
      _
    // Predicated region
    $region50: #{tpu_custom_call.1} parent=1 // pred_check
      _
    $region51: #{tpu_custom_call.1} parent=1 // pred_check_branch
      %533 = sbr.rel (0) target = $region53
    $region52: #{tpu_custom_call.1} parent=1 // pred_region
      %535 = dma.done [#allocation4], 128
    $region53: #{tpu_custom_call.1} parent=1 // pred_fallthru
      _
    %536 = vsyncpa [#allocation3], 1
    %537 = vsyncpa [#allocation6], 1
    %538 = vsyncpa [#allocation9], 1
    %539 = vsyncpa [#allocation4], 1

</llo_original>
